<compile_context>
chip_gen: v5e
topology: v5e:2x2
jax: 0.10.0
libtpu: 0.0.40
codegen_flags: <defaults>
</compile_context>

<pallas_src>
import jax
import jax.numpy as jnp
from jax.experimental import pallas as pl
from jax.experimental.pallas import tpu as pltpu


# ----------------------------- Pallas kernel --------------------------------

def _ffn_kernel(x_ref, w1_ref, b1_ref, w2_ref, b2_ref, o_ref):
    # Cast activations to the matmul dtype on the VPU (cheap, hidden under MXU).
    x = x_ref[...].astype(w1_ref.dtype)
    # First linear: (TM, H) @ (H, 4H), bf16 operands, f32 accumulation on the MXU.
    h = jnp.dot(x, w1_ref[...], preferred_element_type=jnp.float32)
    h = jnp.maximum(h + b1_ref[...], 0.0)          # bias + ReLU in f32 on the VPU
    # TODO(synk): dropout is eval-mode identity and intentionally omitted.
    h = h.astype(w2_ref.dtype)                     # back to bf16 for the second MXU pass
    # Second linear: (TM, 4H) @ (4H, H), f32 accumulation.
    y = jnp.dot(h, w2_ref[...], preferred_element_type=jnp.float32)
    o_ref[...] = (y + b2_ref[...]).astype(o_ref.dtype)


# ------------------------------ wrapper --------------------------------------

def _round_up(v, m):
    return -(-v // m) * m


def ffn_forward(x, w1, b1, w2, b2, *, tm=512, matmul_dtype=jnp.bfloat16,
                out_dtype=None):
    """FFN forward: relu(x @ w1 + b1) @ w2 + b2.

    x: (..., HSIZE); weights stored as (in_features, out_features), i.e. transposed
    w.r.t. PyTorch nn.Linear.weight, so y = x @ W + b.
    """
    orig_shape = x.shape
    H = orig_shape[-1]
    MID = w1.shape[1]
    out_dtype = out_dtype if out_dtype is not None else x.dtype

    # Fold all leading dims into a single row axis; keep x's dtype (cast in-kernel).
    x2 = x.reshape(-1, H)
    M = x2.shape[0]

    # Row-tile selection:
    #  * whole problem in one tile when it fits (no per-step overhead at demo size)
    #  * otherwise at least 2 row tiles so the "parallel" axis can feed both
    #    TensorCores on v7x; tiles rounded to a multiple of 16 (bf16 sublane pack).
    if M <= tm:
        tm_eff = _round_up(M, 16)
    else:
        tm_eff = min(_round_up(tm, 16), _round_up(pl.cdiv(M, 2), 16))
    grid_m = pl.cdiv(M, tm_eff)        # ragged last tile handled by Pallas (no pad/slice)

    # Weights as bf16 MXU operands (resident in VMEM), biases stay f32 on the VPU.
    w1c = w1.astype(matmul_dtype)
    w2c = w2.astype(matmul_dtype)
    b1r = b1.reshape(1, MID).astype(jnp.float32)
    b2r = b2.reshape(1, H).astype(jnp.float32)

    # Raise the scoped VMEM limit only if the resident footprint needs it
    # (never at H=128; relevant if HSIZE/MID scale up).
    mm_bytes = jnp.dtype(matmul_dtype).itemsize
    vmem_bytes = 2 * (
        tm_eff * H * x2.dtype.itemsize            # x tile (double-buffered)
        + H * MID * mm_bytes + MID * 4            # w1, b1
        + MID * H * mm_bytes + H * 4              # w2, b2
        + tm_eff * H * jnp.dtype(out_dtype).itemsize  # out tile
    )
    cparams = {"dimension_semantics": ("parallel",)}
    if vmem_bytes > (16 << 20):
        cparams["vmem_limit_bytes"] = int(min(vmem_bytes + (4 << 20), 100 << 20))

    out = pl.pallas_call(
        _ffn_kernel,
        out_shape=jax.ShapeDtypeStruct((M, H), out_dtype),
        grid_spec=pltpu.PrefetchScalarGridSpec(
            num_scalar_prefetch=0,
            grid=(grid_m,),
            in_specs=[
                pl.BlockSpec((tm_eff, H), lambda i: (i, 0)),  # x row tile (f32)
                pl.BlockSpec((H, MID), lambda i: (0, 0)),     # w1 (resident)
                pl.BlockSpec((1, MID), lambda i: (0, 0)),     # b1
                pl.BlockSpec((MID, H), lambda i: (0, 0)),     # w2 (resident)
                pl.BlockSpec((1, H), lambda i: (0, 0)),       # b2
            ],
            out_specs=pl.BlockSpec((tm_eff, H), lambda i: (i, 0)),
        ),
        compiler_params=pltpu.CompilerParams(**cparams),
    )(x2, w1c, b1r, w2c, b2r)

    return out.reshape(orig_shape)


# ------------------------- pure-JAX reference ---------------------------------

def ffn_reference(x, w1, b1, w2, b2):
    h = jnp.maximum(x @ w1 + b1, 0.0)
    return h @ w2 + b2


# --------------------------------- main ----------------------------------------

if __name__ == "__main__":
    # Small shapes implied by the module: __C.HSIZE = 128, mid = 4*HSIZE.
    B, S, HSIZE = 2, 16, 128
    MID = 4 * HSIZE

    key = jax.random.PRNGKey(0)
    k0, k1, k2, k3, k4 = jax.random.split(key, 5)
    scale = 0.05

    x = jax.random.normal(k0, (B, S, HSIZE), jnp.float32)
    w1 = scale * jax.random.normal(k1, (HSIZE, MID), jnp.float32)
    b1 = scale * jax.random.normal(k2, (MID,), jnp.float32)
    w2 = scale * jax.random.normal(k3, (MID, HSIZE), jnp.float32)
    b2 = scale * jax.random.normal(k4, (HSIZE,), jnp.float32)

    out = ffn_forward(x, w1, b1, w2, b2)
    out = jax.block_until_ready(out)

    ref = ffn_reference(x, w1, b1, w2, b2)
    assert out.shape == (B, S, HSIZE)
    max_err = float(jnp.max(jnp.abs(out - ref)))
    # Tolerance relaxed vs pure-f32 because the kernel uses bf16 MXU operands
    # with f32 accumulation (fast path on v6e/v7x, exact-width K on v5e).
    assert jnp.allclose(out, ref, rtol=2e-2, atol=3e-2), max_err

    print("KERNEL_OK")
</pallas_src>

<mosaic_0001>
module attributes {stable_mosaic.version = 11 : i64} {
  func.func @_ffn_kernel(%arg0: i32, %arg1: memref<32x128xf32, #tpu.memory_space<vmem>>, %arg2: memref<128x512xbf16, #tpu.memory_space<vmem>>, %arg3: memref<1x512xf32, #tpu.memory_space<vmem>>, %arg4: memref<512x128xbf16, #tpu.memory_space<vmem>>, %arg5: memref<1x128xf32, #tpu.memory_space<vmem>>, %arg6: memref<32x128xf32, #tpu.memory_space<vmem>>) attributes {dimension_semantics = [#tpu.dimension_semantics<parallel>], iteration_bounds = array<i64: 1>, scalar_prefetch = 0 : i64, scratch_operands = 0 : i64, tpu.core_type = #tpu.core_type<tc>, window_params = [{transform_indices = @transform_0, window_bounds = array<i64: 32, 128>}, {pipeline_mode = #tpu.pipeline_mode<synchronous>, transform_indices = @transform_1, window_bounds = array<i64: 128, 512>}, {pipeline_mode = #tpu.pipeline_mode<synchronous>, transform_indices = @transform_2, window_bounds = array<i64: 1, 512>}, {pipeline_mode = #tpu.pipeline_mode<synchronous>, transform_indices = @transform_3, window_bounds = array<i64: 512, 128>}, {pipeline_mode = #tpu.pipeline_mode<synchronous>, transform_indices = @transform_4, window_bounds = array<i64: 1, 128>}, {transform_indices = @transform_5, window_bounds = array<i64: 32, 128>}]} {
    %c0 = arith.constant 0 : index
    %c0_0 = arith.constant 0 : index
    %0 = vector.load %arg1[%c0, %c0_0] : memref<32x128xf32, #tpu.memory_space<vmem>>, vector<32x128xf32>
    %1 = arith.truncf %0 : vector<32x128xf32> to vector<32x128xbf16>
    %c0_1 = arith.constant 0 : index
    %c0_2 = arith.constant 0 : index
    %2 = vector.load %arg2[%c0_1, %c0_2] : memref<128x512xbf16, #tpu.memory_space<vmem>>, vector<128x512xbf16>
    %cst = arith.constant dense<0.000000e+00> : vector<32x512xf32>
    %3 = tpu.matmul %1, %2, %cst {dimension_numbers = #tpu.dot_dimension_numbers<[1], [0], [0], [1], [0, 0, 1, 1], [], []>} : vector<32x128xbf16>, vector<128x512xbf16>, vector<32x512xf32> -> vector<32x512xf32>
    %c0_3 = arith.constant 0 : index
    %c0_4 = arith.constant 0 : index
    %4 = vector.load %arg3[%c0_3, %c0_4] : memref<1x512xf32, #tpu.memory_space<vmem>>, vector<1x512xf32>
    %5 = vector.broadcast %4 : vector<1x512xf32> to vector<32x512xf32>
    %6 = arith.addf %3, %5 : vector<32x512xf32>
    %cst_5 = arith.constant 0.000000e+00 : f32
    %7 = vector.broadcast %cst_5 : f32 to vector<32x512xf32>
    %8 = arith.maximumf %6, %7 : vector<32x512xf32>
    %9 = arith.truncf %8 : vector<32x512xf32> to vector<32x512xbf16>
    %c0_6 = arith.constant 0 : index
    %c0_7 = arith.constant 0 : index
    %10 = vector.load %arg4[%c0_6, %c0_7] : memref<512x128xbf16, #tpu.memory_space<vmem>>, vector<512x128xbf16>
    %cst_8 = arith.constant dense<0.000000e+00> : vector<32x128xf32>
    %11 = tpu.matmul %9, %10, %cst_8 {dimension_numbers = #tpu.dot_dimension_numbers<[1], [0], [0], [1], [0, 0, 1, 1], [], []>} : vector<32x512xbf16>, vector<512x128xbf16>, vector<32x128xf32> -> vector<32x128xf32>
    %c0_9 = arith.constant 0 : index
    %c0_10 = arith.constant 0 : index
    %12 = vector.load %arg5[%c0_9, %c0_10] : memref<1x128xf32, #tpu.memory_space<vmem>>, vector<1x128xf32>
    %13 = vector.broadcast %12 : vector<1x128xf32> to vector<32x128xf32>
    %14 = arith.addf %11, %13 : vector<32x128xf32>
    %c0_11 = arith.constant 0 : index
    %c0_12 = arith.constant 0 : index
    %15 = vector.load %arg6[%c0_11, %c0_12] : memref<32x128xf32, #tpu.memory_space<vmem>>, vector<32x128xf32>
    tpu.vector_store %arg6[%c0_11, %c0_12], %14 {strides = array<i32>} : memref<32x128xf32, #tpu.memory_space<vmem>>, vector<32x128xf32>,
    return
  }
  func.func @transform_0(%arg0: i32) -> (i32, i32) {
    %c0_i32 = arith.constant 0 : i32
    %c0_i32_0 = arith.constant 0 : i32
    return %arg0, %c0_i32 : i32, i32
  }
  func.func @transform_1(%arg0: i32) -> (i32, i32) {
    %c0_i32 = arith.constant 0 : i32
    %c0_i32_0 = arith.constant 0 : i32
    %c0_i32_1 = arith.constant 0 : i32
    return %c0_i32, %c0_i32_0 : i32, i32
  }
  func.func @transform_2(%arg0: i32) -> (i32, i32) {
    %c0_i32 = arith.constant 0 : i32
    %c0_i32_0 = arith.constant 0 : i32
    %c0_i32_1 = arith.constant 0 : i32
    return %c0_i32, %c0_i32_0 : i32, i32
  }
  func.func @transform_3(%arg0: i32) -> (i32, i32) {
    %c0_i32 = arith.constant 0 : i32
    %c0_i32_0 = arith.constant 0 : i32
    %c0_i32_1 = arith.constant 0 : i32
    return %c0_i32, %c0_i32_0 : i32, i32
  }
  func.func @transform_4(%arg0: i32) -> (i32, i32) {
    %c0_i32 = arith.constant 0 : i32
    %c0_i32_0 = arith.constant 0 : i32
    %c0_i32_1 = arith.constant 0 : i32
    return %c0_i32, %c0_i32_0 : i32, i32
  }
  func.func @transform_5(%arg0: i32) -> (i32, i32) {
    %c0_i32 = arith.constant 0 : i32
    %c0_i32_0 = arith.constant 0 : i32
    return %arg0, %c0_i32 : i32, i32
  }
}

</mosaic_0001>

<llo_original>
// kernel: tpu_custom_call.1
$region0: #{tpu_custom_call.1}
  #allocation0 [shape = 'u32[]', space=smem, size = 0x4, offset = 0x4, fixed_abs, tag = 'smem constant byte address 0x4 - core index']
  #allocation1 [shape = 'u32[72,128]{1,0:T(1,128)}', space=vmem, size = 0x9000, scoped, tag = 'internal scratch']
  %s0 = inlined_call_operand.hbm [shape: f32[32,128], index: 0, kind: input, shape index: {}]
  %s1 = inlined_call_operand.hbm [shape: bf16[128,512], index: 1, kind: input, shape index: {}]
  %s2 = inlined_call_operand.hbm [shape: f32[1,512], index: 2, kind: input, shape index: {}]
  %s3 = inlined_call_operand.hbm [shape: bf16[512,128], index: 3, kind: input, shape index: {}]
  %s4 = inlined_call_operand.vmem [shape: f32[1,128], index: 4, kind: input, shape index: {}]
  %s5 = inlined_call_operand.hbm [shape: f32[32,128], index: 5, kind: output, shape index: {}]
  %s6 = sld [smem:[#allocation0]]
  $region46: #{tpu_custom_call.1} parent=0
    _
  %s8 = ssub.s32 1, %s6
  %s9 = scalar_select 0, %s8, %s6
  $region1: #{tpu_custom_call.1} parent=0
    #allocation2 [shape = 'u8[16384]{0}', space=vmem, size = 0x4000, scoped, tag = 'input window, operand 0, single buffered']
    #allocation3 [shape = 's32[1]{0}', space=sflag, size = 0x4, scoped, tag = 'scoped memory for tpu_custom_call.1']
    #allocation4 [shape = 's32[1]{0}', space=sflag, size = 0x4, scoped, tag = 'scoped memory for tpu_custom_call.1']
    #allocation5 [shape = 'u8[131072]{0}', space=vmem, size = 0x20000, scoped, tag = 'input window, operand 1, single buffered']
    #allocation6 [shape = 's32[1]{0}', space=sflag, size = 0x4, scoped, tag = 'scoped memory for tpu_custom_call.1']
    #allocation7 [shape = 'u8[2048]{0}', space=vmem, size = 0x800, scoped, tag = 'input window, operand 2, single buffered']
    #allocation8 [shape = 'u8[131072]{0}', space=vmem, size = 0x20000, scoped, tag = 'input window, operand 3, single buffered']
    #allocation9 [shape = 's32[1]{0}', space=sflag, size = 0x4, scoped, tag = 'scoped memory for tpu_custom_call.1']
    #allocation10 [shape = 'u8[16384]{0}', space=vmem, size = 0x4000, scoped, tag = 'output window, operand 0, single buffered']
    %10 = vsyncpa [#allocation3], 0
    %11 = vsyncpa [#allocation6], 0
    %12 = vsyncpa [#allocation9], 0
    %13 = vsyncpa [#allocation4], 0
    // Predicated region
    $region2: #{tpu_custom_call.1} parent=1 // pred_check
      _
    $region3: #{tpu_custom_call.1} parent=1 // pred_check_branch
      %15 = sbr.rel (0) target = $region5
    $region4: #{tpu_custom_call.1} parent=1 // pred_region
      %17 = vsyncadd [#allocation3], 0
      %s18 = sshll.u32 %s0, 4
      %s19 = int_to_ptr.hbm [resolvable:$true] %s18
      %s20 = sshll.u32 [#allocation2], 4
      %s21 = int_to_ptr.vmem [resolvable:$true] %s20
      %26 = dma.hbm_to_vmem [thread:$0]  %s19, 512, %s21, [#allocation3], 128, 128, 8
    $region5: #{tpu_custom_call.1} parent=1 // pred_fallthru
      _
    // Predicated region
    $region6: #{tpu_custom_call.1} parent=1 // pred_check
      _
    $region7: #{tpu_custom_call.1} parent=1 // pred_check_branch
      %28 = sbr.rel (0) target = $region9
    $region8: #{tpu_custom_call.1} parent=1 // pred_region
      %30 = vsyncadd [#allocation6], 0
      %s31 = sshll.u32 %s1, 4
      %s32 = int_to_ptr.hbm [resolvable:$true] %s31
      %s33 = sshll.u32 [#allocation5], 4
      %s34 = int_to_ptr.vmem [resolvable:$true] %s33
      %39 = dma.hbm_to_vmem [thread:$0]  %s32, 4096, %s34, [#allocation6], 256, 256, 16
    $region9: #{tpu_custom_call.1} parent=1 // pred_fallthru
      _
    // Predicated region
    $region10: #{tpu_custom_call.1} parent=1 // pred_check
      _
    $region11: #{tpu_custom_call.1} parent=1 // pred_check_branch
      %41 = sbr.rel (0) target = $region13
    $region12: #{tpu_custom_call.1} parent=1 // pred_region
      %43 = vsyncadd [#allocation6], 0
      %s45 = sshll.u32 %s2, 4
      %s46 = int_to_ptr.hbm [resolvable:$true] %s45
      %s47 = sshll.u32 [#allocation7], 4
      %s48 = int_to_ptr.vmem [resolvable:$true] %s47
      %50 = dma.hbm_to_vmem [thread:$0]  %s46, 64, %s48, [#allocation6]
    $region13: #{tpu_custom_call.1} parent=1 // pred_fallthru
      _
    // Predicated region
    $region14: #{tpu_custom_call.1} parent=1 // pred_check
      _
    $region15: #{tpu_custom_call.1} parent=1 // pred_check_branch
      %52 = sbr.rel (0) target = $region17
    $region16: #{tpu_custom_call.1} parent=1 // pred_region
      %54 = vsyncadd [#allocation9], 0
      %s55 = sshll.u32 %s3, 4
      %s56 = int_to_ptr.hbm [resolvable:$true] %s55
      %s57 = sshll.u32 [#allocation8], 4
      %s58 = int_to_ptr.vmem [resolvable:$true] %s57
      %63 = dma.hbm_to_vmem [thread:$0]  %s56, 4096, %s58, [#allocation9], 64, 64, 4
    $region17: #{tpu_custom_call.1} parent=1 // pred_fallthru
      _
    // Predicated region
    $region18: #{tpu_custom_call.1} parent=1 // pred_check
      _
    $region19: #{tpu_custom_call.1} parent=1 // pred_check_branch
      %65 = sbr.rel (0) target = $region21
    $region20: #{tpu_custom_call.1} parent=1 // pred_region
      _
    $region21: #{tpu_custom_call.1} parent=1 // pred_fallthru
      _
    // Predicated region
    $region22: #{tpu_custom_call.1} parent=1 // pred_check
      _
    $region23: #{tpu_custom_call.1} parent=1 // pred_check_branch
      %67 = sbr.rel (0) target = $region25
    $region24: #{tpu_custom_call.1} parent=1 // pred_region
      %69 = dma.done [#allocation3], 512
    $region25: #{tpu_custom_call.1} parent=1 // pred_fallthru
      _
    // Predicated region
    $region26: #{tpu_custom_call.1} parent=1 // pred_check
      _
    $region27: #{tpu_custom_call.1} parent=1 // pred_check_branch
      %71 = sbr.rel (0) target = $region29
    $region28: #{tpu_custom_call.1} parent=1 // pred_region
      %73 = dma.done [#allocation6], 4096
    $region29: #{tpu_custom_call.1} parent=1 // pred_fallthru
      _
    // Predicated region
    $region30: #{tpu_custom_call.1} parent=1 // pred_check
      _
    $region31: #{tpu_custom_call.1} parent=1 // pred_check_branch
      %75 = sbr.rel (0) target = $region33
    $region32: #{tpu_custom_call.1} parent=1 // pred_region
      %77 = dma.done [#allocation6], 64
    $region33: #{tpu_custom_call.1} parent=1 // pred_fallthru
      _
    // Predicated region
    $region34: #{tpu_custom_call.1} parent=1 // pred_check
      _
    $region35: #{tpu_custom_call.1} parent=1 // pred_check_branch
      %79 = sbr.rel (0) target = $region37
    $region36: #{tpu_custom_call.1} parent=1 // pred_region
      %81 = dma.done [#allocation9], 4096
    $region37: #{tpu_custom_call.1} parent=1 // pred_fallthru
      _
    %v82 = vld [vmem:[#allocation2] sm:$0xff]
    %v83 = vld [vmem:[#allocation2 + $0x8] sm:$0xff]
    %v84 = vld [vmem:[#allocation2 + $0x10] sm:$0xff]
    %v85 = vld [vmem:[#allocation2 + $0x18] sm:$0xff]
    %v86 = vpack.c.bf16 %v83, %v82
    %v87 = vpack.c.bf16 %v85, %v84
    %v88 = vld [vmem:[#allocation5] sm:$0xff]
    %v89 = vld [vmem:[#allocation5 + $0x8] sm:$0xff]
    %v90 = vld [vmem:[#allocation5 + $0x10] sm:$0xff]
    %v91 = vld [vmem:[#allocation5 + $0x18] sm:$0xff]
    %v92 = vld [vmem:[#allocation5 + $0x20] sm:$0xff]
    %v93 = vld [vmem:[#allocation5 + $0x28] sm:$0xff]
    %v94 = vld [vmem:[#allocation5 + $0x30] sm:$0xff]
    %v95 = vld [vmem:[#allocation5 + $0x38] sm:$0xff]
    %v96 = vld [vmem:[#allocation5 + $0x40] sm:$0xff]
    %v97 = vld [vmem:[#allocation5 + $0x48] sm:$0xff]
    %v98 = vld [vmem:[#allocation5 + $0x50] sm:$0xff]
    %v99 = vld [vmem:[#allocation5 + $0x58] sm:$0xff]
    %v100 = vld [vmem:[#allocation5 + $0x60] sm:$0xff]
    %v101 = vld [vmem:[#allocation5 + $0x68] sm:$0xff]
    %v102 = vld [vmem:[#allocation5 + $0x70] sm:$0xff]
    %v103 = vld [vmem:[#allocation5 + $0x78] sm:$0xff]
    %v104 = vld [vmem:[#allocation5 + $0x80] sm:$0xff]
    %v105 = vld [vmem:[#allocation5 + $0x88] sm:$0xff]
    %v106 = vld [vmem:[#allocation5 + $0x90] sm:$0xff]
    %v107 = vld [vmem:[#allocation5 + $0x98] sm:$0xff]
    %v108 = vld [vmem:[#allocation5 + $0xa0] sm:$0xff]
    %v109 = vld [vmem:[#allocation5 + $0xa8] sm:$0xff]
    %v110 = vld [vmem:[#allocation5 + $0xb0] sm:$0xff]
    %v111 = vld [vmem:[#allocation5 + $0xb8] sm:$0xff]
    %v112 = vld [vmem:[#allocation5 + $0xc0] sm:$0xff]
    %v113 = vld [vmem:[#allocation5 + $0xc8] sm:$0xff]
    %v114 = vld [vmem:[#allocation5 + $0xd0] sm:$0xff]
    %v115 = vld [vmem:[#allocation5 + $0xd8] sm:$0xff]
    %v116 = vld [vmem:[#allocation5 + $0xe0] sm:$0xff]
    %v117 = vld [vmem:[#allocation5 + $0xe8] sm:$0xff]
    %v118 = vld [vmem:[#allocation5 + $0xf0] sm:$0xff]
    %v119 = vld [vmem:[#allocation5 + $0xf8] sm:$0xff]
    %v120 = vld [vmem:[#allocation7] sm:$0xf]
    %v122 = vperm.slane %v120, 0
    %v123 = vperm.slane %v120, 1
    %v124 = vperm.slane %v120, 2
    %v125 = vperm.slane %v120, 3
    %v162 = vunpack.c.l.b16 %v88
    %v163 = vunpack.c.h.b16 %v88
    %v164 = vunpack.c.l.b16 %v89
    %v165 = vunpack.c.h.b16 %v89
    %v166 = vunpack.c.l.b16 %v90
    %v167 = vunpack.c.h.b16 %v90
    %v168 = vunpack.c.l.b16 %v91
    %v169 = vunpack.c.h.b16 %v91
    %v170 = vunpack.c.l.b16 %v92
    %v171 = vunpack.c.h.b16 %v92
    %v172 = vunpack.c.l.b16 %v93
    %v173 = vunpack.c.h.b16 %v93
    %v174 = vunpack.c.l.b16 %v94
    %v175 = vunpack.c.h.b16 %v94
    %v176 = vunpack.c.l.b16 %v95
    %v177 = vunpack.c.h.b16 %v95
    %v178 = vunpack.c.l.b16 %v96
    %v179 = vunpack.c.h.b16 %v96
    %v180 = vunpack.c.l.b16 %v97
    %v181 = vunpack.c.h.b16 %v97
    %v182 = vunpack.c.l.b16 %v98
    %v183 = vunpack.c.h.b16 %v98
    %v184 = vunpack.c.l.b16 %v99
    %v185 = vunpack.c.h.b16 %v99
    %v186 = vunpack.c.l.b16 %v100
    %v187 = vunpack.c.h.b16 %v100
    %v188 = vunpack.c.l.b16 %v101
    %v189 = vunpack.c.h.b16 %v101
    %v190 = vunpack.c.l.b16 %v102
    %v191 = vunpack.c.h.b16 %v102
    %v192 = vunpack.c.l.b16 %v103
    %v193 = vunpack.c.h.b16 %v103
    %v194 = vunpack.c.l.b16 %v104
    %v195 = vunpack.c.h.b16 %v104
    %v196 = vunpack.c.l.b16 %v105
    %v197 = vunpack.c.h.b16 %v105
    %v198 = vunpack.c.l.b16 %v106
    %v199 = vunpack.c.h.b16 %v106
    %v200 = vunpack.c.l.b16 %v107
    %v201 = vunpack.c.h.b16 %v107
    %v202 = vunpack.c.l.b16 %v108
    %v203 = vunpack.c.h.b16 %v108
    %v204 = vunpack.c.l.b16 %v109
    %v205 = vunpack.c.h.b16 %v109
    %v206 = vunpack.c.l.b16 %v110
    %v207 = vunpack.c.h.b16 %v110
    %v208 = vunpack.c.l.b16 %v111
    %v209 = vunpack.c.h.b16 %v111
    %v210 = vunpack.c.l.b16 %v112
    %v211 = vunpack.c.h.b16 %v112
    %v212 = vunpack.c.l.b16 %v113
    %v213 = vunpack.c.h.b16 %v113
    %v214 = vunpack.c.l.b16 %v114
    %v215 = vunpack.c.h.b16 %v114
    %v216 = vunpack.c.l.b16 %v115
    %v217 = vunpack.c.h.b16 %v115
    %v218 = vunpack.c.l.b16 %v116
    %v219 = vunpack.c.h.b16 %v116
    %v220 = vunpack.c.l.b16 %v117
    %v221 = vunpack.c.h.b16 %v117
    %v222 = vunpack.c.l.b16 %v118
    %v223 = vunpack.c.h.b16 %v118
    %v224 = vunpack.c.l.b16 %v119
    %v225 = vunpack.c.h.b16 %v119
    %v226 = vpack.c.b16 %v166, %v162
    %v227 = vpack.c.b16 %v167, %v163
    %v228 = vpack.c.b16 %v168, %v164
    %v229 = vpack.c.b16 %v169, %v165
    %v230 = vpack.c.b16 %v174, %v170
    %v231 = vpack.c.b16 %v175, %v171
    %v232 = vpack.c.b16 %v176, %v172
    %v233 = vpack.c.b16 %v177, %v173
    %v234 = vpack.c.b16 %v182, %v178
    %v235 = vpack.c.b16 %v183, %v179
    %v236 = vpack.c.b16 %v184, %v180
    %v237 = vpack.c.b16 %v185, %v181
    %v238 = vpack.c.b16 %v190, %v186
    %v239 = vpack.c.b16 %v191, %v187
    %v240 = vpack.c.b16 %v192, %v188
    %v241 = vpack.c.b16 %v193, %v189
    %v242 = vpack.c.b16 %v198, %v194
    %v243 = vpack.c.b16 %v199, %v195
    %v244 = vpack.c.b16 %v200, %v196
    %v245 = vpack.c.b16 %v201, %v197
    %v246 = vpack.c.b16 %v206, %v202
    %v247 = vpack.c.b16 %v207, %v203
    %v248 = vpack.c.b16 %v208, %v204
    %v249 = vpack.c.b16 %v209, %v205
    %v250 = vpack.c.b16 %v214, %v210
    %v251 = vpack.c.b16 %v215, %v211
    %v252 = vpack.c.b16 %v216, %v212
    %v253 = vpack.c.b16 %v217, %v213
    %v254 = vpack.c.b16 %v222, %v218
    %v255 = vpack.c.b16 %v223, %v219
    %v256 = vpack.c.b16 %v224, %v220
    %v257 = vpack.c.b16 %v225, %v221
    %290 = vmatpush.bf16.msra.mxu0 %v254
    %291 = vmatpush.bf16.msra.mxu0 %v250
    %292 = vmatpush.bf16.msra.mxu0 %v246
    %293 = vmatpush.bf16.msra.mxu0 %v242
    %294 = vmatpush.bf16.msra.mxu0 %v238
    %295 = vmatpush.bf16.msra.mxu0 %v234
    %296 = vmatpush.bf16.msra.mxu0 %v230
    %297 = vmatpush.bf16.msra.mxu0 %v226
    %298 = vmatmul.bf16.gmra.mxu0 %v86
    %v299 = vpop.f32.mrf.mxu0
    %v300 = vadd.f32 %v122, %v299
    %v301 = vpop.f32.mrf.mxu0
    %v302 = vadd.f32 %v122, %v301
    %303 = vmatmul.bf16.gmra.mxu0 %v87
    %v304 = vpop.f32.mrf.mxu0
    %v305 = vadd.f32 %v122, %v304
    %v306 = vpop.f32.mrf.mxu0
    %v307 = vadd.f32 %v122, %v306
    %308 = vdwg.mxu0
    %309 = vmatpush.bf16.msra.mxu0 %v255
    %310 = vmatpush.bf16.msra.mxu0 %v251
    %311 = vmatpush.bf16.msra.mxu0 %v247
    %312 = vmatpush.bf16.msra.mxu0 %v243
    %313 = vmatpush.bf16.msra.mxu0 %v239
    %314 = vmatpush.bf16.msra.mxu0 %v235
    %315 = vmatpush.bf16.msra.mxu0 %v231
    %316 = vmatpush.bf16.msra.mxu0 %v227
    %317 = vmatmul.bf16.gmra.mxu0 %v86
    %v318 = vpop.f32.mrf.mxu0
    %v319 = vadd.f32 %v123, %v318
    %v320 = vpop.f32.mrf.mxu0
    %v321 = vadd.f32 %v123, %v320
    %322 = vmatmul.bf16.gmra.mxu0 %v87
    %v323 = vpop.f32.mrf.mxu0
    %v324 = vadd.f32 %v123, %v323
    %v325 = vpop.f32.mrf.mxu0
    %v326 = vadd.f32 %v123, %v325
    %327 = vdwg.mxu0
    %328 = vmatpush.bf16.msra.mxu0 %v256
    %329 = vmatpush.bf16.msra.mxu0 %v252
    %330 = vmatpush.bf16.msra.mxu0 %v248
    %331 = vmatpush.bf16.msra.mxu0 %v244
    %332 = vmatpush.bf16.msra.mxu0 %v240
    %333 = vmatpush.bf16.msra.mxu0 %v236
    %334 = vmatpush.bf16.msra.mxu0 %v232
    %335 = vmatpush.bf16.msra.mxu0 %v228
    %336 = vmatmul.bf16.gmra.mxu0 %v86
    %v337 = vpop.f32.mrf.mxu0
    %v338 = vadd.f32 %v124, %v337
    %v339 = vpop.f32.mrf.mxu0
    %v340 = vadd.f32 %v124, %v339
    %341 = vmatmul.bf16.gmra.mxu0 %v87
    %v342 = vpop.f32.mrf.mxu0
    %v343 = vadd.f32 %v124, %v342
    %v344 = vpop.f32.mrf.mxu0
    %v345 = vadd.f32 %v124, %v344
    %346 = vdwg.mxu0
    %347 = vmatpush.bf16.msra.mxu0 %v257
    %348 = vmatpush.bf16.msra.mxu0 %v253
    %349 = vmatpush.bf16.msra.mxu0 %v249
    %350 = vmatpush.bf16.msra.mxu0 %v245
    %351 = vmatpush.bf16.msra.mxu0 %v241
    %352 = vmatpush.bf16.msra.mxu0 %v237
    %353 = vmatpush.bf16.msra.mxu0 %v233
    %354 = vmatpush.bf16.msra.mxu0 %v229
    %355 = vmatmul.bf16.gmra.mxu0 %v86
    %v356 = vpop.f32.mrf.mxu0
    %v357 = vadd.f32 %v125, %v356
    %v358 = vpop.f32.mrf.mxu0
    %v359 = vadd.f32 %v125, %v358
    %360 = vmatmul.bf16.gmra.mxu0 %v87
    %v361 = vpop.f32.mrf.mxu0
    %v362 = vadd.f32 %v125, %v361
    %v363 = vpop.f32.mrf.mxu0
    %v364 = vadd.f32 %v125, %v363
    %365 = vdwg.mxu0
    %v366 = vmax.f32 %v300, 0.0
    %v367 = vmax.f32 %v319, 0.0
    %v368 = vmax.f32 %v338, 0.0
    %v369 = vmax.f32 %v357, 0.0
    %v370 = vmax.f32 %v302, 0.0
    %v371 = vmax.f32 %v321, 0.0
    %v372 = vmax.f32 %v340, 0.0
    %v373 = vmax.f32 %v359, 0.0
    %v374 = vmax.f32 %v305, 0.0
    %v375 = vmax.f32 %v324, 0.0
    %v376 = vmax.f32 %v343, 0.0
    %v377 = vmax.f32 %v362, 0.0
    %v378 = vmax.f32 %v307, 0.0
    %v379 = vmax.f32 %v326, 0.0
    %v380 = vmax.f32 %v345, 0.0
    %v381 = vmax.f32 %v364, 0.0
    %v382 = vpack.c.bf16 %v370, %v366
    %v383 = vpack.c.bf16 %v371, %v367
    %v384 = vpack.c.bf16 %v372, %v368
    %v385 = vpack.c.bf16 %v373, %v369
    %v386 = vpack.c.bf16 %v378, %v374
    %v387 = vpack.c.bf16 %v379, %v375
    %v388 = vpack.c.bf16 %v380, %v376
    %v389 = vpack.c.bf16 %v381, %v377
    %v390 = vld [vmem:[#allocation8] sm:$0xf]
    %v391 = vld [vmem:[#allocation8 + $0x4] sm:$0xf]
    %v392 = vld [vmem:[#allocation8 + $0x8] sm:$0xf]
    %v393 = vld [vmem:[#allocation8 + $0xc] sm:$0xf]
    %v394 = vld [vmem:[#allocation8 + $0x10] sm:$0xf]
    %v395 = vld [vmem:[#allocation8 + $0x14] sm:$0xf]
    %v396 = vld [vmem:[#allocation8 + $0x18] sm:$0xf]
    %v397 = vld [vmem:[#allocation8 + $0x1c] sm:$0xf]
    %v398 = vld [vmem:[#allocation8 + $0x20] sm:$0xf]
    %v399 = vld [vmem:[#allocation8 + $0x24] sm:$0xf]
    %v400 = vld [vmem:[#allocation8 + $0x28] sm:$0xf]
    %v401 = vld [vmem:[#allocation8 + $0x2c] sm:$0xf]
    %v402 = vld [vmem:[#allocation8 + $0x30] sm:$0xf]
    %v403 = vld [vmem:[#allocation8 + $0x34] sm:$0xf]
    %v404 = vld [vmem:[#allocation8 + $0x38] sm:$0xf]
    %v405 = vld [vmem:[#allocation8 + $0x3c] sm:$0xf]
    %v406 = vld [vmem:[#allocation8 + $0x40] sm:$0xf]
    %v407 = vld [vmem:[#allocation8 + $0x44] sm:$0xf]
    %v408 = vld [vmem:[#allocation8 + $0x48] sm:$0xf]
    %v409 = vld [vmem:[#allocation8 + $0x4c] sm:$0xf]
    %v410 = vld [vmem:[#allocation8 + $0x50] sm:$0xf]
    %v411 = vld [vmem:[#allocation8 + $0x54] sm:$0xf]
    %v412 = vld [vmem:[#allocation8 + $0x58] sm:$0xf]
    %v413 = vld [vmem:[#allocation8 + $0x5c] sm:$0xf]
    %v414 = vld [vmem:[#allocation8 + $0x60] sm:$0xf]
    %v415 = vld [vmem:[#allocation8 + $0x64] sm:$0xf]
    %v416 = vld [vmem:[#allocation8 + $0x68] sm:$0xf]
    %v417 = vld [vmem:[#allocation8 + $0x6c] sm:$0xf]
    %v418 = vld [vmem:[#allocation8 + $0x70] sm:$0xf]
    %v419 = vld [vmem:[#allocation8 + $0x74] sm:$0xf]
    %v420 = vld [vmem:[#allocation8 + $0x78] sm:$0xf]
    %v421 = vld [vmem:[#allocation8 + $0x7c] sm:$0xf]
    %v422 = vld [vmem:[#allocation8 + $0x80] sm:$0xf]
    %v423 = vld [vmem:[#allocation8 + $0x84] sm:$0xf]
    %v424 = vld [vmem:[#allocation8 + $0x88] sm:$0xf]
    %v425 = vld [vmem:[#allocation8 + $0x8c] sm:$0xf]
    %v426 = vld [vmem:[#allocation8 + $0x90] sm:$0xf]
    %v427 = vld [vmem:[#allocation8 + $0x94] sm:$0xf]
    %v428 = vld [vmem:[#allocation8 + $0x98] sm:$0xf]
    %v429 = vld [vmem:[#allocation8 + $0x9c] sm:$0xf]
    %v430 = vld [vmem:[#allocation8 + $0xa0] sm:$0xf]
    %v431 = vld [vmem:[#allocation8 + $0xa4] sm:$0xf]
    %v432 = vld [vmem:[#allocation8 + $0xa8] sm:$0xf]
    %v433 = vld [vmem:[#allocation8 + $0xac] sm:$0xf]
    %v434 = vld [vmem:[#allocation8 + $0xb0] sm:$0xf]
    %v435 = vld [vmem:[#allocation8 + $0xb4] sm:$0xf]
    %v436 = vld [vmem:[#allocation8 + $0xb8] sm:$0xf]
    %v437 = vld [vmem:[#allocation8 + $0xbc] sm:$0xf]
    %v438 = vld [vmem:[#allocation8 + $0xc0] sm:$0xf]
    %v439 = vld [vmem:[#allocation8 + $0xc4] sm:$0xf]
    %v440 = vld [vmem:[#allocation8 + $0xc8] sm:$0xf]
    %v441 = vld [vmem:[#allocation8 + $0xcc] sm:$0xf]
    %v442 = vld [vmem:[#allocation8 + $0xd0] sm:$0xf]
    %v443 = vld [vmem:[#allocation8 + $0xd4] sm:$0xf]
    %v444 = vld [vmem:[#allocation8 + $0xd8] sm:$0xf]
    %v445 = vld [vmem:[#allocation8 + $0xdc] sm:$0xf]
    %v446 = vld [vmem:[#allocation8 + $0xe0] sm:$0xf]
    %v447 = vld [vmem:[#allocation8 + $0xe4] sm:$0xf]
    %v448 = vld [vmem:[#allocation8 + $0xe8] sm:$0xf]
    %v449 = vld [vmem:[#allocation8 + $0xec] sm:$0xf]
    %v450 = vld [vmem:[#allocation8 + $0xf0] sm:$0xf]
    %v451 = vld [vmem:[#allocation8 + $0xf4] sm:$0xf]
    %v452 = vld [vmem:[#allocation8 + $0xf8] sm:$0xf]
    %v453 = vld [vmem:[#allocation8 + $0xfc] sm:$0xf]
    %v454 = vld [vmem:[%s4] sm:$0x1]
    %v456 = vperm.slane %v454, 0
    %v522 = vunpack.c.l.b16 %v390
    %v523 = vunpack.c.l.b16 %v391
    %v524 = vunpack.c.l.b16 %v392
    %v525 = vunpack.c.l.b16 %v393
    %v526 = vunpack.c.l.b16 %v394
    %v527 = vunpack.c.l.b16 %v395
    %v528 = vunpack.c.l.b16 %v396
    %v529 = vunpack.c.l.b16 %v397
    %v530 = vunpack.c.l.b16 %v398
    %v531 = vunpack.c.l.b16 %v399
    %v532 = vunpack.c.l.b16 %v400
    %v533 = vunpack.c.l.b16 %v401
    %v534 = vunpack.c.l.b16 %v402
    %v535 = vunpack.c.l.b16 %v403
    %v536 = vunpack.c.l.b16 %v404
    %v537 = vunpack.c.l.b16 %v405
    %v538 = vunpack.c.l.b16 %v406
    %v539 = vunpack.c.l.b16 %v407
    %v540 = vunpack.c.l.b16 %v408
    %v541 = vunpack.c.l.b16 %v409
    %v542 = vunpack.c.l.b16 %v410
    %v543 = vunpack.c.l.b16 %v411
    %v544 = vunpack.c.l.b16 %v412
    %v545 = vunpack.c.l.b16 %v413
    %v546 = vunpack.c.l.b16 %v414
    %v547 = vunpack.c.l.b16 %v415
    %v548 = vunpack.c.l.b16 %v416
    %v549 = vunpack.c.l.b16 %v417
    %v550 = vunpack.c.l.b16 %v418
    %v551 = vunpack.c.l.b16 %v419
    %v552 = vunpack.c.l.b16 %v420
    %v553 = vunpack.c.l.b16 %v421
    %v554 = vunpack.c.l.b16 %v422
    %v555 = vunpack.c.l.b16 %v423
    %v556 = vunpack.c.l.b16 %v424
    %v557 = vunpack.c.l.b16 %v425
    %v558 = vunpack.c.l.b16 %v426
    %v559 = vunpack.c.l.b16 %v427
    %v560 = vunpack.c.l.b16 %v428
    %v561 = vunpack.c.l.b16 %v429
    %v562 = vunpack.c.l.b16 %v430
    %v563 = vunpack.c.l.b16 %v431
    %v564 = vunpack.c.l.b16 %v432
    %v565 = vunpack.c.l.b16 %v433
    %v566 = vunpack.c.l.b16 %v434
    %v567 = vunpack.c.l.b16 %v435
    %v568 = vunpack.c.l.b16 %v436
    %v569 = vunpack.c.l.b16 %v437
    %v570 = vunpack.c.l.b16 %v438
    %v571 = vunpack.c.l.b16 %v439
    %v572 = vunpack.c.l.b16 %v440
    %v573 = vunpack.c.l.b16 %v441
    %v574 = vunpack.c.l.b16 %v442
    %v575 = vunpack.c.l.b16 %v443
    %v576 = vunpack.c.l.b16 %v444
    %v577 = vunpack.c.l.b16 %v445
    %v578 = vunpack.c.l.b16 %v446
    %v579 = vunpack.c.l.b16 %v447
    %v580 = vunpack.c.l.b16 %v448
    %v581 = vunpack.c.l.b16 %v449
    %v582 = vunpack.c.l.b16 %v450
    %v583 = vunpack.c.l.b16 %v451
    %v584 = vunpack.c.l.b16 %v452
    %v585 = vunpack.c.l.b16 %v453
    %v586 = vpack.c.b16 %v523, %v522
    %v587 = vpack.c.b16 %v525, %v524
    %v588 = vpack.c.b16 %v527, %v526
    %v589 = vpack.c.b16 %v529, %v528
    %v590 = vpack.c.b16 %v531, %v530
    %v591 = vpack.c.b16 %v533, %v532
    %v592 = vpack.c.b16 %v535, %v534
    %v593 = vpack.c.b16 %v537, %v536
    %v594 = vpack.c.b16 %v539, %v538
    %v595 = vpack.c.b16 %v541, %v540
    %v596 = vpack.c.b16 %v543, %v542
    %v597 = vpack.c.b16 %v545, %v544
    %v598 = vpack.c.b16 %v547, %v546
    %v599 = vpack.c.b16 %v549, %v548
    %v600 = vpack.c.b16 %v551, %v550
    %v601 = vpack.c.b16 %v553, %v552
    %v602 = vpack.c.b16 %v555, %v554
    %v603 = vpack.c.b16 %v557, %v556
    %v604 = vpack.c.b16 %v559, %v558
    %v605 = vpack.c.b16 %v561, %v560
    %v606 = vpack.c.b16 %v563, %v562
    %v607 = vpack.c.b16 %v565, %v564
    %v608 = vpack.c.b16 %v567, %v566
    %v609 = vpack.c.b16 %v569, %v568
    %v610 = vpack.c.b16 %v571, %v570
    %v611 = vpack.c.b16 %v573, %v572
    %v612 = vpack.c.b16 %v575, %v574
    %v613 = vpack.c.b16 %v577, %v576
    %v614 = vpack.c.b16 %v579, %v578
    %v615 = vpack.c.b16 %v581, %v580
    %v616 = vpack.c.b16 %v583, %v582
    %v617 = vpack.c.b16 %v585, %v584
    %650 = vmatpush.bf16.msra.mxu0 %v593
    %651 = vmatpush.bf16.msra.mxu0 %v592
    %652 = vmatpush.bf16.msra.mxu0 %v591
    %653 = vmatpush.bf16.msra.mxu0 %v590
    %654 = vmatpush.bf16.msra.mxu0 %v589
    %655 = vmatpush.bf16.msra.mxu0 %v588
    %656 = vmatpush.bf16.msra.mxu0 %v587
    %657 = vmatpush.bf16.msra.mxu0 %v586
    %658 = vmatmul.bf16.gmra.mxu0 %v382
    %v659 = vpop.f32.mrf.mxu0
    %v660 = vadd.f32 %v456, %v659
    %v661 = vpop.f32.mrf.mxu0
    %v662 = vadd.f32 %v456, %v661
    %663 = vmatmul.bf16.gmra.mxu0 %v386
    %v664 = vpop.f32.mrf.mxu0
    %v665 = vadd.f32 %v456, %v664
    %v666 = vpop.f32.mrf.mxu0
    %v667 = vadd.f32 %v456, %v666
    %668 = vdwg.mxu0
    %669 = vmatpush.bf16.msra.mxu0 %v601
    %670 = vmatpush.bf16.msra.mxu0 %v600
    %671 = vmatpush.bf16.msra.mxu0 %v599
    %672 = vmatpush.bf16.msra.mxu0 %v598
    %673 = vmatpush.bf16.msra.mxu0 %v597
    %674 = vmatpush.bf16.msra.mxu0 %v596
    %675 = vmatpush.bf16.msra.mxu0 %v595
    %676 = vmatpush.bf16.msra.mxu0 %v594
    %677 = vmatmul.bf16.gmra.mxu0 %v383
    %v678 = vpop.f32.mrf.mxu0
    %v679 = vadd.f32 %v660, %v678
    %v680 = vpop.f32.mrf.mxu0
    %v681 = vadd.f32 %v662, %v680
    %682 = vmatmul.bf16.gmra.mxu0 %v387
    %v683 = vpop.f32.mrf.mxu0
    %v684 = vadd.f32 %v665, %v683
    %v685 = vpop.f32.mrf.mxu0
    %v686 = vadd.f32 %v667, %v685
    %687 = vdwg.mxu0
    %688 = vmatpush.bf16.msra.mxu0 %v609
    %689 = vmatpush.bf16.msra.mxu0 %v608
    %690 = vmatpush.bf16.msra.mxu0 %v607
    %691 = vmatpush.bf16.msra.mxu0 %v606
    %692 = vmatpush.bf16.msra.mxu0 %v605
    %693 = vmatpush.bf16.msra.mxu0 %v604
    %694 = vmatpush.bf16.msra.mxu0 %v603
    %695 = vmatpush.bf16.msra.mxu0 %v602
    %696 = vmatmul.bf16.gmra.mxu0 %v384
    %v697 = vpop.f32.mrf.mxu0
    %v698 = vadd.f32 %v679, %v697
    %v699 = vpop.f32.mrf.mxu0
    %v700 = vadd.f32 %v681, %v699
    %701 = vmatmul.bf16.gmra.mxu0 %v388
    %v702 = vpop.f32.mrf.mxu0
    %v703 = vadd.f32 %v684, %v702
    %v704 = vpop.f32.mrf.mxu0
    %v705 = vadd.f32 %v686, %v704
    %706 = vdwg.mxu0
    %707 = vmatpush.bf16.msra.mxu0 %v617
    %708 = vmatpush.bf16.msra.mxu0 %v616
    %709 = vmatpush.bf16.msra.mxu0 %v615
    %710 = vmatpush.bf16.msra.mxu0 %v614
    %711 = vmatpush.bf16.msra.mxu0 %v613
    %712 = vmatpush.bf16.msra.mxu0 %v612
    %713 = vmatpush.bf16.msra.mxu0 %v611
    %714 = vmatpush.bf16.msra.mxu0 %v610
    %715 = vmatmul.bf16.gmra.mxu0 %v385
    %v716 = vpop.f32.mrf.mxu0
    %v717 = vadd.f32 %v698, %v716
    %v718 = vpop.f32.mrf.mxu0
    %v719 = vadd.f32 %v700, %v718
    %720 = vmatmul.bf16.gmra.mxu0 %v389
    %v721 = vpop.f32.mrf.mxu0
    %v722 = vadd.f32 %v703, %v721
    %v723 = vpop.f32.mrf.mxu0
    %v724 = vadd.f32 %v705, %v723
    %725 = vdwg.mxu0
    %726 = vst [vmem:[#allocation10] sm:$0xff] %v717
    %727 = vst [vmem:[#allocation10 + $0x8] sm:$0xff] %v719
    %728 = vst [vmem:[#allocation10 + $0x10] sm:$0xff] %v722
    %729 = vst [vmem:[#allocation10 + $0x18] sm:$0xff] %v724
    // Predicated region
    $region38: #{tpu_custom_call.1} parent=1 // pred_check
      _
    $region39: #{tpu_custom_call.1} parent=1 // pred_check_branch
      %731 = sbr.rel (0) target = $region41
    $region40: #{tpu_custom_call.1} parent=1 // pred_region
      %733 = vsyncadd [#allocation4], 0
      %s734 = sshll.u32 [#allocation10], 4
      %s735 = int_to_ptr.vmem [resolvable:$true] %s734
      %s736 = sshll.u32 %s5, 4
      %s737 = int_to_ptr.hbm [resolvable:$true] %s736
      %742 = dma.vmem_to_hbm [thread:$0]  %s735, 512, %s737, [#allocation4], 128, 128, 8
    $region41: #{tpu_custom_call.1} parent=1 // pred_fallthru
      _
    // Predicated region
    $region42: #{tpu_custom_call.1} parent=1 // pred_check
      _
    $region43: #{tpu_custom_call.1} parent=1 // pred_check_branch
      %744 = sbr.rel (0) target = $region45
    $region44: #{tpu_custom_call.1} parent=1 // pred_region
      %746 = dma.done [#allocation4], 512
    $region45: #{tpu_custom_call.1} parent=1 // pred_fallthru
      _
    %747 = vsyncpa [#allocation3], 1
    %748 = vsyncpa [#allocation6], 1
    %749 = vsyncpa [#allocation9], 1
    %750 = vsyncpa [#allocation4], 1

</llo_original>
